<compile_context>
chip_gen: v5e
topology: v5e:2x2
jax: 0.10.0
libtpu: 0.0.40
codegen_flags: <defaults>
</compile_context>

<pallas_src>
import jax
import jax.numpy as jnp
from jax.experimental import pallas as pl
from jax.experimental.pallas import tpu as pltpu


# ---------------------------------------------------------------------------
# Pallas kernel: per-batch pointwise conv as (Cout,Cin) @ (Cin, L_tile) + bias
# ---------------------------------------------------------------------------

def _conv1x1_kernel(x_ref, w_ref, b_ref, o_ref):
    # x_ref: (Cin, tl), w_ref: (Cout, Cin), b_ref: (Cout, 1), o_ref: (Cout, tl)
    acc = jnp.dot(w_ref[...], x_ref[...], preferred_element_type=jnp.float32)
    o_ref[...] = (acc + b_ref[...]).astype(o_ref.dtype)


def _pick_l_tile(L, cin, cout, n_batch, itemsize,
                 block_budget_bytes=12 * 1024 * 1024):
    """Largest lane-dense tile over the flattened spatial dim.

    Budget covers the double-buffered input (cin x tl) and output (cout x tl)
    blocks; kept well under the 32 MiB scoped-VMEM limit so it is safe on v7x
    (64 MiB physical) as well as v5e/v6e (128 MiB physical).
    """
    if L <= 128:
        return L                            # block == full dim: always legal
    gran = 256 if L >= 256 else 128         # 256-wide tiles feed v6e/v7x MXU fully
    per_col = 2 * (cin + cout) * itemsize   # double-buffered x + out columns
    tl = max(gran, (block_budget_bytes // per_col) // gran * gran)
    tl = min(tl, max(gran, (L // gran) * gran))
    # Keep at least ~4 grid steps when possible so both v7x TensorCores get work.
    while n_batch * pl.cdiv(L, tl) < 4 and tl > gran:
        tl = max(gran, (tl // 2) // gran * gran)
    return tl


# ---------------------------------------------------------------------------
# Wrappers
# ---------------------------------------------------------------------------

def conv2d_same_1x1_pallas(x, weight, bias, stride):
    """Conv2dSame with kernel_size=1 and the given stride (NCHW in / NCHW out).

    TF-"same" padding with kernel=1 is zero padding, so the op is a strided
    spatial subsample followed by a channel-mixing matmul.  In NCHW the matmul
    is naturally  W(Cout,Cin) @ x[n](Cin, Ho*Wo)  with no transposes.
    """
    n, cin, h, w = x.shape
    cout = weight.shape[0]
    s = 1 if stride is None else stride

    xs = x[:, :, ::s, ::s]                  # (N, Cin, Ho, Wo); fused into the
    ho, wo = xs.shape[2], xs.shape[3]       # kernel's input DMA when possible
    L = ho * wo
    xm = xs.reshape(n, cin, L)              # contiguous -> free reshape

    wt = weight.reshape(cout, cin)
    b2 = bias.reshape(cout, 1)

    tl = _pick_l_tile(L, cin, cout, n, jnp.dtype(x.dtype).itemsize)
    grid = (n, pl.cdiv(L, tl))

    out = pl.pallas_call(
        _conv1x1_kernel,
        out_shape=jax.ShapeDtypeStruct((n, cout, L), x.dtype),
        grid=grid,
        in_specs=[
            pl.BlockSpec((None, cin, tl), lambda b, l: (b, 0, l)),
            pl.BlockSpec((cout, cin), lambda b, l: (0, 0)),
            pl.BlockSpec((cout, 1), lambda b, l: (0, 0)),
        ],
        out_specs=pl.BlockSpec((None, cout, tl), lambda b, l: (b, 0, l)),
        compiler_params=pltpu.CompilerParams(
            dimension_semantics=("parallel", "parallel"),
            vmem_limit_bytes=32 * 1024 * 1024,
            # Allow XLA to fuse the strided-subsample producer of operand 0 (x)
            # into the kernel's input DMA instead of a separate HBM pass.
            allow_input_fusion=[True, False, False],
        ),
    )(xm, wt, b2)

    # (N, Cout, Ho*Wo) is already NCHW-flat -> free reshape, no transpose.
    return out.reshape(n, cout, ho, wo)


class IdentityOrReduce:
    """JAX/Pallas port of the PyTorch IdentityOrReduce module."""

    def __init__(self, inputs=None, outputs=None, kernel=1, stride=None,
                 search=True, key=None, **kwargs):
        self.is_identity = (stride == 1 and inputs == outputs)
        self.stride = stride
        if not self.is_identity:
            if key is None:
                key = jax.random.PRNGKey(0)
            kw, kb = jax.random.split(key)
            # Shapes/init matching nn.Conv2d(inputs, outputs, 1).
            fan_in = float(inputs)
            bound = 1.0 / jnp.sqrt(fan_in)
            self.weight = jax.random.uniform(
                kw, (outputs, inputs), jnp.float32, -bound, bound)
            self.bias = jax.random.uniform(
                kb, (outputs,), jnp.float32, -bound, bound)

    def __call__(self, x):
        if self.is_identity:
            # nn.Identity: a pure no-op — no kernel / no HBM copy needed.
            return x
        return conv2d_same_1x1_pallas(x, self.weight, self.bias, self.stride)


# ---------------------------------------------------------------------------
# Main
# ---------------------------------------------------------------------------

if __name__ == "__main__":
    key = jax.random.PRNGKey(0)
    kx, kx2, kmod, kmod2 = jax.random.split(key, 4)

    # --- Reduce branch: stride=2, channel change 4->8 --------------------
    x = jax.random.normal(kx, (2, 4, 16, 16), jnp.float32)
    mod = IdentityOrReduce(inputs=4, outputs=8, kernel=1, stride=2, key=kmod)
    y = jax.block_until_ready(jax.jit(lambda a: mod(a))(x))
    assert y.shape == (2, 8, 8, 8), y.shape

    xs = x[:, :, ::2, ::2]
    y_ref = (jnp.einsum("oc,nchw->nohw", mod.weight, xs)
             + mod.bias[None, :, None, None])
    assert jnp.allclose(y, y_ref, atol=1e-4, rtol=1e-4), \
        float(jnp.max(jnp.abs(y - y_ref)))

    # --- Reduce branch with ragged spatial tiling (exercises cdiv grid) ---
    x2 = jax.random.normal(kx2, (1, 4, 20, 24), jnp.float32)   # L = 480
    mod2 = IdentityOrReduce(inputs=4, outputs=8, kernel=1, stride=1, key=kmod2)
    y2 = jax.block_until_ready(jax.jit(lambda a: mod2(a))(x2))
    assert y2.shape == (1, 8, 20, 24), y2.shape
    y2_ref = (jnp.einsum("oc,nchw->nohw", mod2.weight, x2)
              + mod2.bias[None, :, None, None])
    assert jnp.allclose(y2, y2_ref, atol=1e-4, rtol=1e-4), \
        float(jnp.max(jnp.abs(y2 - y2_ref)))

    # --- Identity branch: stride==1 and inputs==outputs -> no-op ----------
    mod_id = IdentityOrReduce(inputs=4, outputs=4, kernel=1, stride=1)
    y_id = jax.block_until_ready(mod_id(x))
    assert jnp.array_equal(y_id, x)

    print("KERNEL_OK")
</pallas_src>

<mosaic_0001>
module attributes {stable_mosaic.version = 11 : i64} {
  func.func @_conv1x1_kernel(%arg0: i32, %arg1: i32, %arg2: memref<1x4x64xf32, #tpu.memory_space<vmem>>, %arg3: memref<8x4xf32, #tpu.memory_space<vmem>>, %arg4: memref<8x1xf32, #tpu.memory_space<vmem>>, %arg5: memref<1x8x64xf32, #tpu.memory_space<vmem>>) attributes {dimension_semantics = [#tpu.dimension_semantics<parallel>, #tpu.dimension_semantics<parallel>], iteration_bounds = array<i64: 2, 1>, scalar_prefetch = 0 : i64, scratch_operands = 0 : i64, tpu.core_type = #tpu.core_type<tc>, window_params = [{transform_indices = @transform_0, window_bounds = array<i64: 1, 4, 64>}, {pipeline_mode = #tpu.pipeline_mode<synchronous>, transform_indices = @transform_1, window_bounds = array<i64: 8, 4>}, {pipeline_mode = #tpu.pipeline_mode<synchronous>, transform_indices = @transform_2, window_bounds = array<i64: 8, 1>}, {transform_indices = @transform_3, window_bounds = array<i64: 1, 8, 64>}]} {
    %c0 = arith.constant 0 : index
    %c0_0 = arith.constant 0 : index
    %0 = vector.load %arg3[%c0, %c0_0] : memref<8x4xf32, #tpu.memory_space<vmem>>, vector<8x4xf32>
    %c0_1 = arith.constant 0 : index
    %c0_2 = arith.constant 0 : index
    %c0_3 = arith.constant 0 : index
    %1 = vector.load %arg2[%c0_1, %c0_2, %c0_3] : memref<1x4x64xf32, #tpu.memory_space<vmem>>, vector<1x4x64xf32>
    %2 = vector.shape_cast %1 : vector<1x4x64xf32> to vector<4x64xf32>
    %cst = arith.constant dense<0.000000e+00> : vector<8x64xf32>
    %3 = tpu.matmul %0, %2, %cst {dimension_numbers = #tpu.dot_dimension_numbers<[1], [0], [0], [1], [0, 0, 1, 1], [], []>} : vector<8x4xf32>, vector<4x64xf32>, vector<8x64xf32> -> vector<8x64xf32>
    %c0_4 = arith.constant 0 : index
    %c0_5 = arith.constant 0 : index
    %4 = vector.load %arg4[%c0_4, %c0_5] : memref<8x1xf32, #tpu.memory_space<vmem>>, vector<8x1xf32>
    %5 = vector.broadcast %4 : vector<8x1xf32> to vector<8x64xf32>
    %6 = arith.addf %3, %5 : vector<8x64xf32>
    %c0_6 = arith.constant 0 : index
    %c0_7 = arith.constant 0 : index
    %c0_8 = arith.constant 0 : index
    %7 = vector.load %arg5[%c0_6, %c0_7, %c0_8] : memref<1x8x64xf32, #tpu.memory_space<vmem>>, vector<1x8x64xf32>
    %8 = vector.shape_cast %7 : vector<1x8x64xf32> to vector<8x64xf32>
    %9 = vector.shape_cast %6 : vector<8x64xf32> to vector<1x8x64xf32>
    tpu.vector_store %arg5[%c0_6, %c0_7, %c0_8], %9 {strides = array<i32>} : memref<1x8x64xf32, #tpu.memory_space<vmem>>, vector<1x8x64xf32>,
    return
  }
  func.func @transform_0(%arg0: i32, %arg1: i32) -> (i32, i32, i32) {
    %c0_i32 = arith.constant 0 : i32
    %c0_i32_0 = arith.constant 0 : i32
    return %arg0, %c0_i32, %arg1 : i32, i32, i32
  }
  func.func @transform_1(%arg0: i32, %arg1: i32) -> (i32, i32) {
    %c0_i32 = arith.constant 0 : i32
    %c0_i32_0 = arith.constant 0 : i32
    %c0_i32_1 = arith.constant 0 : i32
    return %c0_i32, %c0_i32_0 : i32, i32
  }
  func.func @transform_2(%arg0: i32, %arg1: i32) -> (i32, i32) {
    %c0_i32 = arith.constant 0 : i32
    %c0_i32_0 = arith.constant 0 : i32
    %c0_i32_1 = arith.constant 0 : i32
    return %c0_i32, %c0_i32_0 : i32, i32
  }
  func.func @transform_3(%arg0: i32, %arg1: i32) -> (i32, i32, i32) {
    %c0_i32 = arith.constant 0 : i32
    %c0_i32_0 = arith.constant 0 : i32
    return %arg0, %c0_i32, %arg1 : i32, i32, i32
  }
}

</mosaic_0001>

<llo_original>
// kernel: _lambda_.1
$region0: #{_lambda_.1}
  #allocation0 [shape = 'u32[]', space=smem, size = 0x4, offset = 0x4, fixed_abs, tag = 'smem constant byte address 0x4 - core index']
  #allocation1 [shape = 'u32[72,128]{1,0:T(1,128)}', space=vmem, size = 0x9000, scoped, tag = 'internal scratch']
  %s0 = inlined_call_operand.vmem [shape: f32[2,4,64], index: 0, kind: input, shape index: {}]
  %s1 = inlined_call_operand.vmem [shape: f32[8,4], index: 1, kind: input, shape index: {}]
  %s2 = inlined_call_operand.vmem [shape: f32[8,1], index: 2, kind: input, shape index: {}]
  %s3 = inlined_call_operand.vmem [shape: f32[2,8,64], index: 3, kind: output, shape index: {}]
  %s4 = sld [smem:[#allocation0]]
  $region45: #{_lambda_.1} parent=0
    _
  %s6 = ssub.s32 1, %s4
  %s7 = scalar_select 0, %s6, %s4
  loop: start=0, step=1, limit=4
  $region2: #{_lambda_.1} parent=0 // loop_pre_header
    _
  $region3: #{_lambda_.1} parent=0 // loop_header
    %s9 = sphi 0, %s13
    %p10 = scmp.ge.s32.totalorder %s9, 4
    %s16 = sphi 0, %s28
    %s17 = sphi 0, %s24
    %s18 = sphi 0, %s16
    %s19 = sphi 0, %s17
    %s20 = sphi 0, %s18
    %s21 = sphi 0, %s19
    %s33 = sphi 0, %s35
    %s36 = sphi 0, %s33
    %s37 = sphi 0, %s36
    %s53 = sphi 0, %s37
    %s57 = sphi 0, %s57
    %s59 = sphi 0, %s57
    %s60 = sphi 0, %s59
    %s74 = sphi 0, %s60
    %s78 = sphi 0, %s78
    %s80 = sphi 0, %s78
    %s81 = sphi 0, %s80
    %s95 = sphi 0, %s81
    %s103 = sphi 0, %s105
    %s106 = sphi 0, %s103
    %s107 = sphi 0, %s106
    %s123 = sphi 0, %s107
  $region4: #{_lambda_.1} parent=0 // loop_header_branch
    %12 = sbr.rel (%p10) target = $region8
  $region5: #{_lambda_.1} parent=0 // loop_body
    %s14 = ssub.s32 %s9, 1
    %s15 = ssub.s32 %s9, 2
    %s22 = sadd.s32 1, %s17
    %p23 = scmp.ge.s32.totalorder %s22, 1
    %s24 = scalar_select %p23, 0, %s22
    %s25 = sadd.s32 1, %s16
    %s26 = scalar_select %p23, %s25, %s16
    %p27 = scmp.ge.s32.totalorder %s26, 2
    %s28 = scalar_select %p27, 0, %s26
    %s29 = ssub.s32 %s16, %s28
    %s30 = ssub.s32 %s17, %s24
    %s31 = sor.u32 %s29, %s30
    %p32 = scmp.eq.s32.totalorder %s31, 0
    %s34 = sadd.s32 %s33, 1
    %s35 = scalar_select %p32, %s33, %s34
    %p38 = pneg %p32
    %p39 = scmp.eq.s32.totalorder %s9, 1
    %p40 = por %p38, %p39
    %p41 = scmp.ne.s32.totalorder %s33, %s36
    %p42 = scmp.eq.s32.totalorder %s9, 0
    %p43 = por %p41, %p42
    %p44 = scmp.ne.s32.totalorder %s33, %s36
    %p45 = scmp.eq.s32.totalorder %s14, 1
    %p46 = por %p44, %p45
    %p47 = scmp.ne.s32.totalorder %s36, %s37
    %p48 = scmp.eq.s32.totalorder %s14, 0
    %p49 = por %p47, %p48
    %p50 = scmp.ne.s32.totalorder %s36, %s37
    %p51 = scmp.eq.s32.totalorder %s15, 1
    %p52 = por %p50, %p51
    %p54 = scmp.ne.s32.totalorder %s37, %s53
    %p55 = scmp.eq.s32.totalorder %s15, 0
    %p56 = por %p54, %p55
    %s58 = sadd.s32 %s57, 1
    %p61 = scmp.eq.s32.totalorder %s9, 1
    %p62 = scmp.ne.s32.totalorder %s57, %s59
    %p63 = scmp.eq.s32.totalorder %s9, 0
    %p64 = por %p62, %p63
    %p65 = scmp.ne.s32.totalorder %s57, %s59
    %p66 = scmp.eq.s32.totalorder %s14, 1
    %p67 = por %p65, %p66
    %p68 = scmp.ne.s32.totalorder %s59, %s60
    %p69 = scmp.eq.s32.totalorder %s14, 0
    %p70 = por %p68, %p69
    %p71 = scmp.ne.s32.totalorder %s59, %s60
    %p72 = scmp.eq.s32.totalorder %s15, 1
    %p73 = por %p71, %p72
    %p75 = scmp.ne.s32.totalorder %s60, %s74
    %p76 = scmp.eq.s32.totalorder %s15, 0
    %p77 = por %p75, %p76
    %s79 = sadd.s32 %s78, 1
    %p82 = scmp.eq.s32.totalorder %s9, 1
    %p83 = scmp.ne.s32.totalorder %s78, %s80
    %p84 = scmp.eq.s32.totalorder %s9, 0
    %p85 = por %p83, %p84
    %p86 = scmp.ne.s32.totalorder %s78, %s80
    %p87 = scmp.eq.s32.totalorder %s14, 1
    %p88 = por %p86, %p87
    %p89 = scmp.ne.s32.totalorder %s80, %s81
    %p90 = scmp.eq.s32.totalorder %s14, 0
    %p91 = por %p89, %p90
    %p92 = scmp.ne.s32.totalorder %s80, %s81
    %p93 = scmp.eq.s32.totalorder %s15, 1
    %p94 = por %p92, %p93
    %p96 = scmp.ne.s32.totalorder %s81, %s95
    %p97 = scmp.eq.s32.totalorder %s15, 0
    %p98 = por %p96, %p97
    %s99 = ssub.s32 %s16, %s28
    %s100 = ssub.s32 %s17, %s24
    %s101 = sor.u32 %s99, %s100
    %p102 = scmp.eq.s32.totalorder %s101, 0
    %s104 = sadd.s32 %s103, 1
    %s105 = scalar_select %p102, %s103, %s104
    %p108 = pneg %p102
    %p109 = scmp.eq.s32.totalorder %s9, 1
    %p110 = por %p108, %p109
    %p111 = scmp.ne.s32.totalorder %s103, %s106
    %p112 = scmp.eq.s32.totalorder %s9, 0
    %p113 = por %p111, %p112
    %p114 = scmp.ne.s32.totalorder %s103, %s106
    %p115 = scmp.eq.s32.totalorder %s14, 1
    %p116 = por %p114, %p115
    %p117 = scmp.ne.s32.totalorder %s106, %s107
    %p118 = scmp.eq.s32.totalorder %s14, 0
    %p119 = por %p117, %p118
    %p120 = scmp.ne.s32.totalorder %s106, %s107
    %p121 = scmp.eq.s32.totalorder %s15, 1
    %p122 = por %p120, %p121
    %p124 = scmp.ne.s32.totalorder %s107, %s123
    %p125 = scmp.eq.s32.totalorder %s15, 0
    %p126 = por %p124, %p125
    %p127 = scmp.le.s32.totalorder 1, %s9
    %p128 = scmp.lt.s32.totalorder %s9, 3
    %p129 = pnand %p127, %p128
    %p130 = pneg %p129
    // Predicated region
    $region9: #{_lambda_.1} parent=5 // pred_check
      _
    $region10: #{_lambda_.1} parent=5 // pred_check_branch
      %132 = sbr.rel (%p129) target = $region12
    $region11: #{_lambda_.1} parent=5 // pred_region
      %s133 = ssub.s32 %s9, 1
      // Predicated region
      $region13: #{_lambda_.1} parent=11 // pred_check
        %p134 = pneg %p70
      $region14: #{_lambda_.1} parent=11 // pred_check_branch
        %136 = sbr.rel (%p134) target = $region16
      $region15: #{_lambda_.1} parent=11 // pred_region
        _
      $region16: #{_lambda_.1} parent=11 // pred_fallthru
        _
      // Predicated region
      $region17: #{_lambda_.1} parent=11 // pred_check
        %p137 = pneg %p91
      $region18: #{_lambda_.1} parent=11 // pred_check_branch
        %139 = sbr.rel (%p137) target = $region20
      $region19: #{_lambda_.1} parent=11 // pred_region
        _
      $region20: #{_lambda_.1} parent=11 // pred_fallthru
        _
    $region12: #{_lambda_.1} parent=5 // pred_fallthru
      _
    %p140 = scmp.lt.s32.totalorder %s9, 2
    // Predicated region
    $region21: #{_lambda_.1} parent=5 // pred_check
      %p141 = pneg %p140
    $region22: #{_lambda_.1} parent=5 // pred_check_branch
      %143 = sbr.rel (%p141) target = $region24
    $region23: #{_lambda_.1} parent=5 // pred_region
      // Predicated region
      $region25: #{_lambda_.1} parent=23 // pred_check
        %p144 = pneg %p43
      $region26: #{_lambda_.1} parent=23 // pred_check_branch
        %146 = sbr.rel (%p144) target = $region28
      $region27: #{_lambda_.1} parent=23 // pred_region
        %p147 = scmp.lt.s32.totalorder %s16, 1
        %s148 = scalar_select %p147, %s16, 1
        %p149 = scmp.lt.s32.totalorder %s17, 0
        %s150 = scalar_select %p149, %s17, 0
        %s151 = sadd.s32 %s150, %s148
        %s152 = smul.addr %s151, 4
        %s153 = scalar_lea.vmem %s0, %s152
      $region28: #{_lambda_.1} parent=23 // pred_fallthru
        _
    $region24: #{_lambda_.1} parent=5 // pred_fallthru
      _
    %p154 = scmp.le.s32.totalorder 1, %s9
    %p155 = scmp.lt.s32.totalorder %s9, 3
    %p156 = pnand %p154, %p155
    %p157 = pneg %p156
    // Predicated region
    $region29: #{_lambda_.1} parent=5 // pred_check
      _
    $region30: #{_lambda_.1} parent=5 // pred_check_branch
      %159 = sbr.rel (%p156) target = $region32
    $region31: #{_lambda_.1} parent=5 // pred_region
      %s160 = ssub.s32 %s9, 1
      %p161 = scmp.lt.s32.totalorder %s18, 1
      %s162 = scalar_select %p161, %s18, 1
      %p163 = scmp.lt.s32.totalorder %s19, 0
      %s164 = scalar_select %p163, %s19, 0
      %s165 = sadd.s32 %s164, %s162
      %s166 = smul.addr %s165, 4
      %s167 = scalar_lea.vmem %s0, %s166
      %p168 = pneg %p49
      %p169 = pneg %p46
      %p170 = pneg %p70
      %p171 = pneg %p67
      %p172 = pneg %p91
      %p173 = pneg %p88
      %p174 = pneg %p119
      %p175 = pneg %p116
      %p176 = scmp.lt.s32.totalorder %s18, 1
      %s177 = scalar_select %p176, %s18, 1
      %p178 = scmp.lt.s32.totalorder %s19, 0
      %s179 = scalar_select %p178, %s19, 0
      %s180 = sadd.s32 %s179, %s177
      %s181 = smul.addr %s180, 8
      %s182 = scalar_lea.vmem %s3, %s181
      %p183 = scmp.lt.s32.totalorder %s18, 1
      %s184 = scalar_select %p183, %s18, 1
      %p185 = scmp.lt.s32.totalorder %s19, 0
      %s186 = scalar_select %p185, %s19, 0
      %s187 = sadd.s32 %s186, %s184
      %s188 = smul.addr %s187, 4
      %s189 = scalar_lea.vmem %s0, %s188
      %p190 = scmp.lt.s32.totalorder %s18, 1
      %s191 = scalar_select %p190, %s18, 1
      %p192 = scmp.lt.s32.totalorder %s19, 0
      %s193 = scalar_select %p192, %s19, 0
      %s194 = sadd.s32 %s193, %s191
      %s195 = smul.addr %s194, 8
      %s196 = scalar_lea.vmem %s3, %s195
      %v197 = vld [vmem:[%s1] sm:$0xff]
      %v198 = vld [vmem:[%s189] sm:$0xf]
      %v199 = vld [vmem:[%s2] sm:$0xff]
      %201 = vset.pattern.permute.xlu0 0
      %202 = vperm.xlu0 %201, %v199
      %v203 = vpop.permute.xlu0 %202
      %vm205 = vcmask 31744
      %v207 = vsel %vm205, %v197, 0
      %vm209 = vcmask 1043456
      %v211 = vsel %vm209, %v198, 0
      %213 = vmatpush.msra.mxu0 0.0
      %214 = vmatpush.msra.mxu0 0.0
      %215 = vmatpush.msra.mxu0 0.0
      %216 = vmatpush.msra.mxu0 0.0
      %217 = vmatpush.msra.mxu0 0.0
      %218 = vmatpush.msra.mxu0 0.0
      %219 = vmatpush.msra.mxu0 0.0
      %220 = vmatpush.msra.mxu0 0.0
      %221 = vmatpush.msra.mxu0 0.0
      %222 = vmatpush.msra.mxu0 0.0
      %223 = vmatpush.msra.mxu0 0.0
      %224 = vmatpush.msra.mxu0 0.0
      %225 = vmatpush.msra.mxu0 0.0
      %226 = vmatpush.msra.mxu0 0.0
      %227 = vmatpush.msra.mxu0 0.0
      %228 = vmatpush.msra.mxu0 %v211
      %229 = vmatmul.f32.gmra.mxu0 %v207
      %v230 = vpop.f32.mrf.mxu0
      %v231 = vadd.f32 %v203, %v230
      %232 = vdwg.mxu0
      %vm233 = vcmask 523264
      %234 = vst.msk [vmem:[%s196] sm:$0xff] %vm233, %v231
      %p235 = scmp.lt.s32.totalorder %s18, 1
      %s236 = scalar_select %p235, %s18, 1
      %p237 = scmp.lt.s32.totalorder %s19, 0
      %s238 = scalar_select %p237, %s19, 0
      %s239 = sadd.s32 %s238, %s236
      %s240 = smul.addr %s239, 8
      %s241 = scalar_lea.vmem %s3, %s240
      // Predicated region
      $region33: #{_lambda_.1} parent=31 // pred_check
        %p242 = pneg %p116
      $region34: #{_lambda_.1} parent=31 // pred_check_branch
        %244 = sbr.rel (%p242) target = $region36
      $region35: #{_lambda_.1} parent=31 // pred_region
        _
      $region36: #{_lambda_.1} parent=31 // pred_fallthru
        _
    $region32: #{_lambda_.1} parent=5 // pred_fallthru
      _
    %p245 = scmp.le.s32.totalorder 2, %s9
    // Predicated region
    $region37: #{_lambda_.1} parent=5 // pred_check
      %p246 = pneg %p245
    $region38: #{_lambda_.1} parent=5 // pred_check_branch
      %248 = sbr.rel (%p246) target = $region40
    $region39: #{_lambda_.1} parent=5 // pred_region
      %s249 = ssub.s32 %s9, 2
      // Predicated region
      $region41: #{_lambda_.1} parent=39 // pred_check
        %p250 = pneg %p122
      $region42: #{_lambda_.1} parent=39 // pred_check_branch
        %252 = sbr.rel (%p250) target = $region44
      $region43: #{_lambda_.1} parent=39 // pred_region
        %p253 = scmp.lt.s32.totalorder %s20, 1
        %s254 = scalar_select %p253, %s20, 1
        %p255 = scmp.lt.s32.totalorder %s21, 0
        %s256 = scalar_select %p255, %s21, 0
        %s257 = sadd.s32 %s256, %s254
        %s258 = smul.addr %s257, 8
        %s259 = scalar_lea.vmem %s3, %s258
      $region44: #{_lambda_.1} parent=39 // pred_fallthru
        _
    $region40: #{_lambda_.1} parent=5 // pred_fallthru
      _
  $region6: #{_lambda_.1} parent=0 // loop_footer
    %s13 = sadd.s32 1, %s9
  $region7: #{_lambda_.1} parent=0 // loop_footer_branch
    %8 = sbr.rel target = $region3
  $region8: #{_lambda_.1} parent=0 // loop_exit
    _

</llo_original>
